<compile_context>
chip_gen: v7x
topology: tpu7x:2x2x1
jax: 0.10.0
libtpu: 0.0.40
codegen_flags: <defaults>
</compile_context>

<pallas_src>
import jax
import jax.numpy as jnp
from jax.experimental import pallas as pl
from jax.experimental.pallas import tpu as pltpu


def _trans_predictor_kernel(feat_ref, w_ref, b_ref, out_ref):
    # feat_ref: (TB, nz) VMEM tile (batch on sublanes, features on lanes)
    # w_ref:    (3, nz)  VMEM tile, resident across all grid steps
    # b_ref:    (3,)     SMEM scalars
    # out_ref:  (TB, 3)  VMEM tile
    feat = feat_ref[...].astype(jnp.float32)            # (TB, nz)
    cols = []
    for j in range(3):                                   # 3 output channels: VPU FMAs + XLU reduce
        wj = w_ref[pl.ds(j, 1), :].astype(jnp.float32)   # (1, nz), broadcast over batch rows
        col = jnp.sum(feat * wj, axis=-1, keepdims=True) # (TB, 1), f32 accumulate
        cols.append(col + b_ref[j])                      # bias scalar from SMEM
    out_ref[...] = jnp.concatenate(cols, axis=-1).astype(out_ref.dtype)


def trans_predictor(feat, weight, bias, *, tb=None):
    """feat: (B, nz); weight: (3, nz); bias: (3,). Returns (B, 3) = feat @ W^T + b."""
    B, nz = feat.shape
    assert weight.shape == (3, nz)
    assert bias.shape == (3,)

    # Batch tile: multiple of 8 sublanes, capped so that double-buffered feat tiles
    # stay far under v7x's 32 MiB default scoped VMEM even for large nz.
    if tb is None:
        tb = B if B <= 1024 else 1024
    num_tiles = pl.cdiv(B, tb)

    itemsize = jnp.dtype(feat.dtype).itemsize
    cost = pl.CostEstimate(
        flops=2 * B * nz * 3,
        bytes_accessed=B * nz * itemsize + B * 3 * itemsize + 3 * nz * itemsize + 3 * 4,
        transcendentals=0,
    )

    return pl.pallas_call(
        _trans_predictor_kernel,
        out_shape=jax.ShapeDtypeStruct((B, 3), feat.dtype),
        grid=(num_tiles,),
        in_specs=[
            pl.BlockSpec((tb, nz), lambda i: (i, 0)),                  # feat: tiled over B
            pl.BlockSpec((3, nz), lambda i: (0, 0)),                   # weight: resident
            pl.BlockSpec(memory_space=pltpu.MemorySpace.SMEM),         # bias: SMEM scalars
        ],
        out_specs=pl.BlockSpec((tb, 3), lambda i: (i, 0)),
        compiler_params=pltpu.CompilerParams(
            dimension_semantics=("parallel",)                          # independent B-tiles
        ),
        cost_estimate=cost,
    )(feat, weight, bias)


if __name__ == "__main__":
    key = jax.random.PRNGKey(0)
    k_feat, k_w, k_b = jax.random.split(key, 3)

    B, nz = 8, 32  # small shapes consistent with the module (nz hidden dim)

    feat = jax.random.normal(k_feat, (B, nz), dtype=jnp.float32)

    # Deterministic synthetic parameters for nn.Linear(nz, 3):
    # weight shape (3, nz), bias shape (3,), mimicking the uniform init range.
    bound = 1.0 / jnp.sqrt(jnp.float32(nz))
    weight = jax.random.uniform(k_w, (3, nz), dtype=jnp.float32,
                                minval=-bound, maxval=bound)
    bias = jax.random.uniform(k_b, (3,), dtype=jnp.float32,
                              minval=-bound, maxval=bound)

    out = trans_predictor(feat, weight, bias)
    out = jax.block_until_ready(out)

    # Reference check in plain JAX (same semantics as torch nn.Linear).
    ref = feat @ weight.T + bias
    assert out.shape == (B, 3)
    assert jnp.allclose(out, ref, atol=1e-5, rtol=1e-5)

    print("KERNEL_OK")
</pallas_src>

<mosaic_0001>
module attributes {stable_mosaic.version = 11 : i64} {
  func.func @_trans_predictor_kernel(%arg0: i32, %arg1: memref<8x32xf32, #tpu.memory_space<vmem>>, %arg2: memref<3x32xf32, #tpu.memory_space<vmem>>, %arg3: memref<3xf32, #tpu.memory_space<smem>>, %arg4: memref<8x3xf32, #tpu.memory_space<vmem>>) attributes {dimension_semantics = [#tpu.dimension_semantics<parallel>], iteration_bounds = array<i64: 1>, scalar_prefetch = 0 : i64, scratch_operands = 0 : i64, tpu.core_type = #tpu.core_type<tc>, window_params = [{transform_indices = @transform_0, window_bounds = array<i64: 8, 32>}, {pipeline_mode = #tpu.pipeline_mode<synchronous>, transform_indices = @transform_1, window_bounds = array<i64: 3, 32>}, {transform_indices = @transform_2, window_bounds = array<i64: 3>}, {transform_indices = @transform_3, window_bounds = array<i64: 8, 3>}]} {
    %c0 = arith.constant 0 : index
    %c0_0 = arith.constant 0 : index
    %0 = vector.load %arg1[%c0, %c0_0] : memref<8x32xf32, #tpu.memory_space<vmem>>, vector<8x32xf32>
    %c0_1 = arith.constant 0 : index
    %c0_2 = arith.constant 0 : index
    %1 = vector.load %arg2[%c0_1, %c0_2] : memref<3x32xf32, #tpu.memory_space<vmem>>, vector<1x32xf32>
    %2 = vector.broadcast %1 : vector<1x32xf32> to vector<8x32xf32>
    %3 = arith.mulf %0, %2 : vector<8x32xf32>
    %cst = arith.constant dense<0.000000e+00> : vector<8xf32>
    %4 = vector.multi_reduction <add>, %3, %cst [1] : vector<8x32xf32> to vector<8xf32>
    %5 = vector.shape_cast %4 : vector<8xf32> to vector<8x1xf32>
    %c0_3 = arith.constant 0 : index
    %6 = memref.load %arg3[%c0_3] : memref<3xf32, #tpu.memory_space<smem>>
    %7 = vector.broadcast %6 : f32 to vector<8x1xf32>
    %8 = arith.addf %5, %7 : vector<8x1xf32>
    %c1 = arith.constant 1 : index
    %c0_4 = arith.constant 0 : index
    %9 = vector.load %arg2[%c1, %c0_4] : memref<3x32xf32, #tpu.memory_space<vmem>>, vector<1x32xf32>
    %10 = vector.broadcast %9 : vector<1x32xf32> to vector<8x32xf32>
    %11 = arith.mulf %0, %10 : vector<8x32xf32>
    %cst_5 = arith.constant dense<0.000000e+00> : vector<8xf32>
    %12 = vector.multi_reduction <add>, %11, %cst_5 [1] : vector<8x32xf32> to vector<8xf32>
    %13 = vector.shape_cast %12 : vector<8xf32> to vector<8x1xf32>
    %c1_6 = arith.constant 1 : index
    %14 = memref.load %arg3[%c1_6] : memref<3xf32, #tpu.memory_space<smem>>
    %15 = vector.broadcast %14 : f32 to vector<8x1xf32>
    %16 = arith.addf %13, %15 : vector<8x1xf32>
    %c2 = arith.constant 2 : index
    %c0_7 = arith.constant 0 : index
    %17 = vector.load %arg2[%c2, %c0_7] : memref<3x32xf32, #tpu.memory_space<vmem>>, vector<1x32xf32>
    %18 = vector.broadcast %17 : vector<1x32xf32> to vector<8x32xf32>
    %19 = arith.mulf %0, %18 : vector<8x32xf32>
    %cst_8 = arith.constant dense<0.000000e+00> : vector<8xf32>
    %20 = vector.multi_reduction <add>, %19, %cst_8 [1] : vector<8x32xf32> to vector<8xf32>
    %21 = vector.shape_cast %20 : vector<8xf32> to vector<8x1xf32>
    %c2_9 = arith.constant 2 : index
    %22 = memref.load %arg3[%c2_9] : memref<3xf32, #tpu.memory_space<smem>>
    %23 = vector.broadcast %22 : f32 to vector<8x1xf32>
    %24 = arith.addf %21, %23 : vector<8x1xf32>
    %25 = tpu.concatenate %8, %16, %24 in 1 : vector<8x1xf32>, vector<8x1xf32>, vector<8x1xf32> -> vector<8x3xf32>
    %c0_10 = arith.constant 0 : index
    %c0_11 = arith.constant 0 : index
    %26 = vector.load %arg4[%c0_10, %c0_11] : memref<8x3xf32, #tpu.memory_space<vmem>>, vector<8x3xf32>
    tpu.vector_store %arg4[%c0_10, %c0_11], %25 {strides = array<i32>} : memref<8x3xf32, #tpu.memory_space<vmem>>, vector<8x3xf32>,
    return
  }
  func.func @transform_0(%arg0: i32) -> (i32, i32) {
    %c0_i32 = arith.constant 0 : i32
    %c0_i32_0 = arith.constant 0 : i32
    return %arg0, %c0_i32 : i32, i32
  }
  func.func @transform_1(%arg0: i32) -> (i32, i32) {
    %c0_i32 = arith.constant 0 : i32
    %c0_i32_0 = arith.constant 0 : i32
    %c0_i32_1 = arith.constant 0 : i32
    return %c0_i32, %c0_i32_0 : i32, i32
  }
  func.func @transform_2(%arg0: i32) -> i32 {
    %c0_i32 = arith.constant 0 : i32
    %c0_i32_0 = arith.constant 0 : i32
    return %c0_i32 : i32
  }
  func.func @transform_3(%arg0: i32) -> (i32, i32) {
    %c0_i32 = arith.constant 0 : i32
    %c0_i32_0 = arith.constant 0 : i32
    return %arg0, %c0_i32 : i32, i32
  }
}

</mosaic_0001>

<llo_original>
// kernel: tpu_custom_call.1
$region0: #{tpu_custom_call.1}
  #allocation0 [shape = 'u32[]', space=smem, size = 0x4, offset = 0x4, fixed_abs, tag = 'smem constant byte address 0x4 - core index']
  #allocation1 [shape = 'u32[144,128]{1,0:T(1,128)}', space=vmem, size = 0x12000, scoped, tag = 'internal scratch']
  %s0 = inlined_call_operand.hbm [shape: f32[8,32], index: 0, kind: input, shape index: {}]
  %s1 = inlined_call_operand.hbm [shape: f32[3,32], index: 1, kind: input, shape index: {}]
  %s2 = inlined_call_operand.vmem [shape: f32[3], index: 2, kind: input, shape index: {}]
  %s3 = inlined_call_operand.vmem [shape: f32[8,3], index: 3, kind: output, shape index: {}]
  %s4 = sld [smem:[#allocation0]]
  $region34: #{tpu_custom_call.1} parent=0
    _
  %s6 = ssub.s32 1, %s4
  %s7 = scalar_select 0, %s6, %s4
  $region1: #{tpu_custom_call.1} parent=0
    #allocation2 [shape = 'u8[4096]{0}', space=vmem, size = 0x1000, scoped, tag = 'input window, operand 0, single buffered']
    #allocation3 [shape = 's32[1]{0}', space=sflag, size = 0x4, scoped, tag = 'scoped memory for tpu_custom_call.1']
    #allocation4 [shape = 's32[1]{0}', space=sflag, size = 0x4, scoped, tag = 'scoped memory for tpu_custom_call.1']
    #allocation5 [shape = 'u8[2048]{0}', space=vmem, size = 0x800, scoped, tag = 'input window, operand 1, single buffered']
    #allocation6 [shape = 's32[1]{0}', space=sflag, size = 0x4, scoped, tag = 'scoped memory for tpu_custom_call.1']
    #allocation7 [shape = 'u8[512]{0}', space=smem, size = 0x200, scoped, tag = 'input window, operand 2, single buffered']
    %8 = vsyncpa [#allocation3], 0
    %9 = vsyncpa [#allocation6], 0
    %10 = vsyncpa [#allocation4], 0
    // Predicated region
    $region2: #{tpu_custom_call.1} parent=1 // pred_check
      _
    $region3: #{tpu_custom_call.1} parent=1 // pred_check_branch
      %12 = sbr.rel (0) target = $region5
    $region4: #{tpu_custom_call.1} parent=1 // pred_region
      %s14 = ssub.s32 128, 128
      %15 = vsyncadd [#allocation3], %s14
      %s17 = sshll.u32 [#allocation2], 4
      %s18 = int_to_ptr.vmem [resolvable:$true] %s17
      %20 = dma.hbm_to_vmem [thread:$0]  %s0, 128, %s18, [#allocation3]
    $region5: #{tpu_custom_call.1} parent=1 // pred_fallthru
      _
    // Predicated region
    $region6: #{tpu_custom_call.1} parent=1 // pred_check
      _
    $region7: #{tpu_custom_call.1} parent=1 // pred_check_branch
      %22 = sbr.rel (0) target = $region9
    $region8: #{tpu_custom_call.1} parent=1 // pred_region
      %s24 = ssub.s32 64, 64
      %25 = vsyncadd [#allocation6], %s24
      %s27 = sshll.u32 [#allocation5], 4
      %s28 = int_to_ptr.vmem [resolvable:$true] %s27
      %30 = dma.hbm_to_vmem [thread:$0]  %s1, 64, %s28, [#allocation6]
    $region9: #{tpu_custom_call.1} parent=1 // pred_fallthru
      _
    // Predicated region
    $region10: #{tpu_custom_call.1} parent=1 // pred_check
      _
    $region11: #{tpu_custom_call.1} parent=1 // pred_check_branch
      %32 = sbr.rel (0) target = $region13
    $region12: #{tpu_custom_call.1} parent=1 // pred_region
      %s34 = ssub.s32 16, 16
      %35 = vsyncadd [#allocation4], %s34
      %s37 = sshll.u32 %s2, 4
      %s38 = int_to_ptr.vmem [resolvable:$true] %s37
      %40 = dma.vmem_to_smem %s38, 16, [#allocation7], [#allocation4]
    $region13: #{tpu_custom_call.1} parent=1 // pred_fallthru
      _
    // Predicated region
    $region14: #{tpu_custom_call.1} parent=1 // pred_check
      _
    $region15: #{tpu_custom_call.1} parent=1 // pred_check_branch
      %42 = sbr.rel (0) target = $region17
    $region16: #{tpu_custom_call.1} parent=1 // pred_region
      %43 = dma.done [#allocation3], 128
    $region17: #{tpu_custom_call.1} parent=1 // pred_fallthru
      _
    // Predicated region
    $region18: #{tpu_custom_call.1} parent=1 // pred_check
      _
    $region19: #{tpu_custom_call.1} parent=1 // pred_check_branch
      %45 = sbr.rel (0) target = $region21
    $region20: #{tpu_custom_call.1} parent=1 // pred_region
      %46 = dma.done [#allocation6], 64
    $region21: #{tpu_custom_call.1} parent=1 // pred_fallthru
      _
    // Predicated region
    $region22: #{tpu_custom_call.1} parent=1 // pred_check
      _
    $region23: #{tpu_custom_call.1} parent=1 // pred_check_branch
      %48 = sbr.rel (0) target = $region25
    $region24: #{tpu_custom_call.1} parent=1 // pred_region
      %49 = dma.done [#allocation4], 16
    $region25: #{tpu_custom_call.1} parent=1 // pred_fallthru
      _
    %50 = sfence
    %v51 = vld [vmem:[#allocation2] sm:$0xff]
    %v52 = vld [vmem:[#allocation5] sm:$0x1]
    %v53 = vlaneseq
    %v54 = vshrl.u32 %v53, 7
    %v55 = vsub.s32 0, %v54
    %v56 = vrot.slane %v52, %v55
    %v57 = vmul.f32 %v51, %v56
    %vm58 = vcmask 261120
    %v59 = vsel %vm58, %v57, 0.0
    %60 = vadd.xlane.f32.xlu0 %v59
    %v61 = vpop.xlane.xlu0 %60
    %s62 = sld [smem:[#allocation7]]
    %v63 = vstv %s62
    %v64 = vadd.f32 %v61, %v63
    %v65 = vld [vmem:[#allocation5 + $0x1] sm:$0x1]
    %v66 = vlaneseq
    %v67 = vshrl.u32 %v66, 7
    %v68 = vsub.s32 0, %v67
    %v69 = vrot.slane %v65, %v68
    %v70 = vmul.f32 %v51, %v69
    %v71 = vsel %vm58, %v70, 0.0
    %72 = vadd.xlane.f32.xlu0 %v71
    %v73 = vpop.xlane.xlu0 %72
    %s74 = sld [smem:[#allocation7 + $0x1]]
    %v75 = vstv %s74
    %v76 = vadd.f32 %v73, %v75
    %v77 = vld [vmem:[#allocation5 + $0x2] sm:$0x1]
    %v78 = vlaneseq
    %v79 = vshrl.u32 %v78, 7
    %v80 = vsub.s32 0, %v79
    %v81 = vrot.slane %v77, %v80
    %v82 = vmul.f32 %v51, %v81
    %v83 = vsel %vm58, %v82, 0.0
    %84 = vadd.xlane.f32.xlu0 %v83
    %v85 = vpop.xlane.xlu0 %84
    %s86 = sld [smem:[#allocation7 + $0x2]]
    %v87 = vstv %s86
    %v88 = vadd.f32 %v85, %v87
    %vm89 = vcmask 7168
    %v90 = vsel %vm89, %v64, %v76
    %vm91 = vcmask 15360
    %v92 = vsel %vm91, %v90, %v88
    %vm93 = vcmask 23552
    %94 = vst.msk [vmem:[%s3] sm:$0xff] %vm93, %v92
    // Predicated region
    $region26: #{tpu_custom_call.1} parent=1 // pred_check
      _
    $region27: #{tpu_custom_call.1} parent=1 // pred_check_branch
      %96 = sbr.rel (0) target = $region29
    $region28: #{tpu_custom_call.1} parent=1 // pred_region
      _
    $region29: #{tpu_custom_call.1} parent=1 // pred_fallthru
      _
    // Predicated region
    $region30: #{tpu_custom_call.1} parent=1 // pred_check
      _
    $region31: #{tpu_custom_call.1} parent=1 // pred_check_branch
      %98 = sbr.rel (0) target = $region33
    $region32: #{tpu_custom_call.1} parent=1 // pred_region
      _
    $region33: #{tpu_custom_call.1} parent=1 // pred_fallthru
      _
    %99 = vsyncpa [#allocation3], 1
    %100 = vsyncpa [#allocation6], 1
    %101 = vsyncpa [#allocation4], 1

</llo_original>
